<compile_context>
chip_gen: v7x
topology: tpu7x:2x2x1
jax: 0.10.0
libtpu: 0.0.40
codegen_flags: <defaults>
</compile_context>

<pallas_src>
import functools

import jax
import jax.numpy as jnp
from jax.experimental import pallas as pl
from jax.experimental.pallas import tpu as pltpu

BN_EPS = 1e-5
LANE = 128  # TPU lane width: all feature dims are padded to a multiple of this.


def actor_kernel(x_ref, w1_ref, b1_ref, w2_ref, b2_ref, w3_ref, b3_ref, out_ref):
    """Full Actor forward in one kernel (all feature dims lane-padded to 128*k).

    x_ref  : [B,  D  ]     input states
    w1_ref : [D,  H1P]     fc1 weight (pre-transposed, output cols zero-padded)
    b1_ref : [1,  H1P]
    w2_ref : [H1P,H2P]     fc2 weight (pre-transposed, rows+cols zero-padded)
    b2_ref : [1,  H2P]
    w3_ref : [H2P,OP ]     fc3 weight (pre-transposed, rows zero-padded, cols padded)
    b3_ref : [1,  OP ]
    out_ref: [B,  OP ]     lane-dense output (padded columns are tanh(0)=0)
    """
    x = x_ref[...]

    # fc1 + ReLU  (MXU matmul, f32 accumulate). Padded H1 columns stay 0.
    h1 = jnp.dot(x, w1_ref[...], preferred_element_type=jnp.float32) + b1_ref[...]
    h1 = jnp.maximum(h1, 0.0)

    # BatchNorm1d, training-mode batch stats (biased variance), gamma=1 / beta=0.
    # Two-pass: mean, then centered sum of squares (no E[x^2]-mean^2 cancellation).
    inv_b = 1.0 / h1.shape[0]
    mean = jnp.sum(h1, axis=0, keepdims=True) * inv_b
    centered = h1 - mean
    var = jnp.sum(centered * centered, axis=0, keepdims=True) * inv_b
    h1n = centered * jax.lax.rsqrt(var + BN_EPS)  # rsqrt -> EUP slot (free-ish)
    # Padded columns: mean=0, centered=0 -> h1n stays exactly 0.

    # fc2 + ReLU (padded H2 columns stay 0).
    h2 = jnp.dot(h1n, w2_ref[...], preferred_element_type=jnp.float32) + b2_ref[...]
    h2 = jnp.maximum(h2, 0.0)

    # fc3 (lane-padded output columns) + tanh; unmasked, lane-dense store.
    out = jnp.dot(h2, w3_ref[...], preferred_element_type=jnp.float32) + b3_ref[...]
    out_ref[...] = jnp.tanh(out)


@jax.jit
def actor_forward_padded(x, w1, b1, w2, b2, w3, b3):
    """Single-op forward. Returns the lane-padded [B, OP] output; consumers read
    the first `output_dim` columns. Params must already be in kernel layout
    (see prepare_params)."""
    if x.ndim == 1:  # mirror torch.unsqueeze(state, 0)
        x = x[None, :]
    B, D = x.shape
    if B == 1:
        # PyTorch BatchNorm1d in training mode rejects batch size 1 (var undefined).
        raise ValueError("Actor forward with training-mode BatchNorm1d requires batch size > 1.")

    H1P = w1.shape[1]
    H2P = w2.shape[1]
    OP = w3.shape[1]  # lane-padded output width

    cost = pl.CostEstimate(
        flops=2 * B * (D * H1P + H1P * H2P + H2P * OP),
        transcendentals=B * OP + H1P,  # tanh per output element + one rsqrt per feature
        bytes_accessed=4 * (x.size + w1.size + b1.size + w2.size + b2.size
                            + w3.size + b3.size + B * OP),
    )

    vmem = pl.BlockSpec(memory_space=pltpu.VMEM)
    return pl.pallas_call(
        actor_kernel,
        out_shape=jax.ShapeDtypeStruct((B, OP), jnp.float32),
        in_specs=[vmem] * 7,
        out_specs=vmem,
        cost_estimate=cost,
    )(x, w1, b1, w2, b2, w3, b3)


def actor_forward(x, w1, b1, w2, b2, w3, b3, *, out_dim):
    """Convenience wrapper: padded kernel call + a cheap view of the valid columns.
    Prefer actor_forward_padded in hot loops and slice at the consumer."""
    return actor_forward_padded(x, w1, b1, w2, b2, w3, b3)[:, :out_dim]


def prepare_params(w1, b1, w2, b2, w3, b3):
    """One-time conversion from PyTorch layout ([out,in] weights, [out] biases) to the
    kernel layout: pre-transposed weights, [1,H] biases, ALL feature dims zero-padded
    to 128-lane multiples. Returns (w1,b1,w2,b2,w3,b3, out_dim)."""
    f32 = jnp.float32
    w1 = jnp.asarray(w1, f32); b1 = jnp.asarray(b1, f32)
    w2 = jnp.asarray(w2, f32); b2 = jnp.asarray(b2, f32)
    w3 = jnp.asarray(w3, f32); b3 = jnp.asarray(b3, f32)

    h1, d = w1.shape
    h2 = w2.shape[0]
    o = w3.shape[0]
    h1p = pl.cdiv(h1, LANE) * LANE
    h2p = pl.cdiv(h2, LANE) * LANE
    op = pl.cdiv(o, LANE) * LANE

    w1_p = jnp.zeros((d, h1p), f32).at[:, :h1].set(w1.T)
    b1_p = jnp.zeros((1, h1p), f32).at[0, :h1].set(b1)
    w2_p = jnp.zeros((h1p, h2p), f32).at[:h1, :h2].set(w2.T)
    b2_p = jnp.zeros((1, h2p), f32).at[0, :h2].set(b2)
    w3_p = jnp.zeros((h2p, op), f32).at[:h2, :o].set(w3.T)
    b3_p = jnp.zeros((1, op), f32).at[0, :o].set(b3)
    return w1_p, b1_p, w2_p, b2_p, w3_p, b3_p, int(o)


def init_actor_params(key, input_dim, output_dim, fc1_units, fc2_units):
    """Deterministic synthetic init mirroring the module's reset_parameters():
       fc1/fc2 weights ~ U(-1/sqrt(out_features), +1/sqrt(out_features)) (hidden_init uses
       weight.size()[0] == out_features), fc3 weights ~ U(-3e-3, 3e-3),
       biases keep PyTorch Linear default ~ U(-1/sqrt(in_features), +1/sqrt(in_features)).
       Returned in PyTorch layout ([out, in] weights, [out] biases)."""
    ks = jax.random.split(key, 6)

    def u(k, shape, lim):
        return jax.random.uniform(k, shape, jnp.float32, -lim, lim)

    lim1 = 1.0 / jnp.sqrt(jnp.float32(fc1_units))
    lim2 = 1.0 / jnp.sqrt(jnp.float32(fc2_units))
    w1 = u(ks[0], (fc1_units, input_dim), lim1)
    b1 = u(ks[1], (fc1_units,), 1.0 / jnp.sqrt(jnp.float32(input_dim)))
    w2 = u(ks[2], (fc2_units, fc1_units), lim2)
    b2 = u(ks[3], (fc2_units,), 1.0 / jnp.sqrt(jnp.float32(fc1_units)))
    w3 = u(ks[4], (output_dim, fc2_units), 0.003)
    b3 = u(ks[5], (output_dim,), 1.0 / jnp.sqrt(jnp.float32(fc2_units)))
    return w1, b1, w2, b2, w3, b3


def actor_forward_ref(x, w1, b1, w2, b2, w3, b3):
    """Pure-JAX reference (PyTorch-layout params) for correctness checking."""
    h1 = jnp.maximum(x @ w1.T + b1, 0.0)
    mean = jnp.mean(h1, axis=0, keepdims=True)
    var = jnp.mean((h1 - mean) ** 2, axis=0, keepdims=True)
    h1n = (h1 - mean) / jnp.sqrt(var + BN_EPS)
    h2 = jnp.maximum(h1n @ w2.T + b2, 0.0)
    return jnp.tanh(h2 @ w3.T + b3)


if __name__ == "__main__":
    key = jax.random.PRNGKey(0)
    k_x, k_p = jax.random.split(key)

    # Small shapes consistent with the module's forward.
    BATCH = 8
    INPUT_DIM = 16
    FC1_UNITS = 64   # ACTOR_FC1_UNITS
    FC2_UNITS = 32   # ACTOR_FC2_UNITS
    OUTPUT_DIM = 4

    x = jax.random.normal(k_x, (BATCH, INPUT_DIM), dtype=jnp.float32)
    torch_layout_params = init_actor_params(k_p, INPUT_DIM, OUTPUT_DIM, FC1_UNITS, FC2_UNITS)

    # One-time layout conversion (kept out of the per-call path on purpose).
    w1, b1, w2, b2, w3, b3, out_dim = prepare_params(*torch_layout_params)

    # Hot path: exactly one op (the pallas_call), lane-padded output.
    out_padded = actor_forward_padded(x, w1, b1, w2, b2, w3, b3)
    out_padded = jax.block_until_ready(out_padded)

    # Consumer-side view of the valid action columns (outside the hot path).
    out = out_padded[:, :out_dim]

    ref = actor_forward_ref(x, *torch_layout_params)
    assert out_padded.shape == (BATCH, LANE), out_padded.shape
    assert out.shape == (BATCH, OUTPUT_DIM), out.shape
    assert jnp.allclose(out, ref, atol=1e-5, rtol=1e-4), "mismatch vs pure-JAX reference"
    # Padded columns must be exactly tanh(0) == 0.
    assert jnp.all(out_padded[:, out_dim:] == 0.0), "padded output columns are not zero"

    print("KERNEL_OK")
</pallas_src>

<mosaic_0001>
module attributes {stable_mosaic.version = 11 : i64} {
  func.func @actor_kernel(%arg0: memref<8x16xf32, #tpu.memory_space<vmem>>, %arg1: memref<16x128xf32, #tpu.memory_space<vmem>>, %arg2: memref<1x128xf32, #tpu.memory_space<vmem>>, %arg3: memref<128x128xf32, #tpu.memory_space<vmem>>, %arg4: memref<1x128xf32, #tpu.memory_space<vmem>>, %arg5: memref<128x128xf32, #tpu.memory_space<vmem>>, %arg6: memref<1x128xf32, #tpu.memory_space<vmem>>, %arg7: memref<8x128xf32, #tpu.memory_space<vmem>>) attributes {dimension_semantics = [], scalar_prefetch = 0 : i64, scratch_operands = 0 : i64, tpu.core_type = #tpu.core_type<tc>} {
    %c0 = arith.constant 0 : index
    %c0_0 = arith.constant 0 : index
    %0 = vector.load %arg0[%c0, %c0_0] : memref<8x16xf32, #tpu.memory_space<vmem>>, vector<8x16xf32>
    %c0_1 = arith.constant 0 : index
    %c0_2 = arith.constant 0 : index
    %1 = vector.load %arg1[%c0_1, %c0_2] : memref<16x128xf32, #tpu.memory_space<vmem>>, vector<16x128xf32>
    %cst = arith.constant dense<0.000000e+00> : vector<8x128xf32>
    %2 = tpu.matmul %0, %1, %cst {dimension_numbers = #tpu.dot_dimension_numbers<[1], [0], [0], [1], [0, 0, 1, 1], [], []>} : vector<8x16xf32>, vector<16x128xf32>, vector<8x128xf32> -> vector<8x128xf32>
    %c0_3 = arith.constant 0 : index
    %c0_4 = arith.constant 0 : index
    %3 = vector.load %arg2[%c0_3, %c0_4] : memref<1x128xf32, #tpu.memory_space<vmem>>, vector<1x128xf32>
    %4 = vector.broadcast %3 : vector<1x128xf32> to vector<8x128xf32>
    %5 = arith.addf %2, %4 : vector<8x128xf32>
    %cst_5 = arith.constant 0.000000e+00 : f32
    %6 = vector.broadcast %cst_5 : f32 to vector<8x128xf32>
    %7 = arith.maximumf %5, %6 : vector<8x128xf32>
    %cst_6 = arith.constant dense<0.000000e+00> : vector<128xf32>
    %8 = vector.multi_reduction <add>, %7, %cst_6 [0] : vector<8x128xf32> to vector<128xf32>
    %9 = vector.shape_cast %8 : vector<128xf32> to vector<1x128xf32>
    %cst_7 = arith.constant 1.250000e-01 : f32
    %10 = vector.broadcast %cst_7 : f32 to vector<1x128xf32>
    %11 = arith.mulf %9, %10 : vector<1x128xf32>
    %12 = vector.broadcast %11 : vector<1x128xf32> to vector<8x128xf32>
    %13 = arith.subf %7, %12 : vector<8x128xf32>
    %14 = arith.mulf %13, %13 : vector<8x128xf32>
    %cst_8 = arith.constant dense<0.000000e+00> : vector<128xf32>
    %15 = vector.multi_reduction <add>, %14, %cst_8 [0] : vector<8x128xf32> to vector<128xf32>
    %16 = vector.shape_cast %15 : vector<128xf32> to vector<1x128xf32>
    %cst_9 = arith.constant 1.250000e-01 : f32
    %17 = vector.broadcast %cst_9 : f32 to vector<1x128xf32>
    %18 = arith.mulf %16, %17 : vector<1x128xf32>
    %cst_10 = arith.constant 9.99999974E-6 : f32
    %19 = vector.broadcast %cst_10 : f32 to vector<1x128xf32>
    %20 = arith.addf %18, %19 : vector<1x128xf32>
    %21 = math.rsqrt %20 : vector<1x128xf32>
    %22 = vector.broadcast %21 : vector<1x128xf32> to vector<8x128xf32>
    %23 = arith.mulf %13, %22 : vector<8x128xf32>
    %c0_11 = arith.constant 0 : index
    %c0_12 = arith.constant 0 : index
    %24 = vector.load %arg3[%c0_11, %c0_12] : memref<128x128xf32, #tpu.memory_space<vmem>>, vector<128x128xf32>
    %cst_13 = arith.constant dense<0.000000e+00> : vector<8x128xf32>
    %25 = tpu.matmul %23, %24, %cst_13 {dimension_numbers = #tpu.dot_dimension_numbers<[1], [0], [0], [1], [0, 0, 1, 1], [], []>} : vector<8x128xf32>, vector<128x128xf32>, vector<8x128xf32> -> vector<8x128xf32>
    %c0_14 = arith.constant 0 : index
    %c0_15 = arith.constant 0 : index
    %26 = vector.load %arg4[%c0_14, %c0_15] : memref<1x128xf32, #tpu.memory_space<vmem>>, vector<1x128xf32>
    %27 = vector.broadcast %26 : vector<1x128xf32> to vector<8x128xf32>
    %28 = arith.addf %25, %27 : vector<8x128xf32>
    %cst_16 = arith.constant 0.000000e+00 : f32
    %29 = vector.broadcast %cst_16 : f32 to vector<8x128xf32>
    %30 = arith.maximumf %28, %29 : vector<8x128xf32>
    %c0_17 = arith.constant 0 : index
    %c0_18 = arith.constant 0 : index
    %31 = vector.load %arg5[%c0_17, %c0_18] : memref<128x128xf32, #tpu.memory_space<vmem>>, vector<128x128xf32>
    %cst_19 = arith.constant dense<0.000000e+00> : vector<8x128xf32>
    %32 = tpu.matmul %30, %31, %cst_19 {dimension_numbers = #tpu.dot_dimension_numbers<[1], [0], [0], [1], [0, 0, 1, 1], [], []>} : vector<8x128xf32>, vector<128x128xf32>, vector<8x128xf32> -> vector<8x128xf32>
    %c0_20 = arith.constant 0 : index
    %c0_21 = arith.constant 0 : index
    %33 = vector.load %arg6[%c0_20, %c0_21] : memref<1x128xf32, #tpu.memory_space<vmem>>, vector<1x128xf32>
    %34 = vector.broadcast %33 : vector<1x128xf32> to vector<8x128xf32>
    %35 = arith.addf %32, %34 : vector<8x128xf32>
    %36 = math.tanh %35 : vector<8x128xf32>
    %c0_22 = arith.constant 0 : index
    %c0_23 = arith.constant 0 : index
    %37 = vector.load %arg7[%c0_22, %c0_23] : memref<8x128xf32, #tpu.memory_space<vmem>>, vector<8x128xf32>
    tpu.vector_store %arg7[%c0_22, %c0_23], %36 {strides = array<i32>} : memref<8x128xf32, #tpu.memory_space<vmem>>, vector<8x128xf32>,
    return
  }
}

</mosaic_0001>

<llo_original>
// kernel: actor_forward_padded.1
$region0: #{actor_forward_padded.1}
  #allocation0 [shape = 'u32[]', space=smem, size = 0x4, offset = 0x4, fixed_abs, tag = 'smem constant byte address 0x4 - core index']
  #allocation1 [shape = 'u32[144,128]{1,0:T(1,128)}', space=vmem, size = 0x12000, scoped, tag = 'internal scratch']
  %s0 = inlined_call_operand.hbm [shape: f32[8,16], index: 0, kind: input, shape index: {}]
  %s1 = inlined_call_operand.hbm [shape: f32[16,128], index: 1, kind: input, shape index: {}]
  %s2 = inlined_call_operand.vmem [shape: f32[1,128], index: 2, kind: input, shape index: {}]
  %s3 = inlined_call_operand.hbm [shape: f32[128,128], index: 3, kind: input, shape index: {}]
  %s4 = inlined_call_operand.vmem [shape: f32[1,128], index: 4, kind: input, shape index: {}]
  %s5 = inlined_call_operand.hbm [shape: f32[128,128], index: 5, kind: input, shape index: {}]
  %s6 = inlined_call_operand.vmem [shape: f32[1,128], index: 6, kind: input, shape index: {}]
  %s7 = inlined_call_operand.hbm [shape: f32[8,128], index: 7, kind: output, shape index: {}]
  %s8 = sld [smem:[#allocation0]]
  $region54: #{actor_forward_padded.1} parent=0
    _
  %s10 = ssub.s32 1, %s8
  %s11 = scalar_select 0, %s10, %s8
  $region1: #{actor_forward_padded.1} parent=0
    #allocation2 [shape = 'u8[4096]{0}', space=vmem, size = 0x1000, scoped, tag = 'input window, operand 0, single buffered']
    #allocation3 [shape = 's32[1]{0}', space=sflag, size = 0x4, scoped, tag = 'scoped memory for actor_forward_padded.1']
    #allocation4 [shape = 's32[1]{0}', space=sflag, size = 0x4, scoped, tag = 'scoped memory for actor_forward_padded.1']
    #allocation5 [shape = 'u8[8192]{0}', space=vmem, size = 0x2000, scoped, tag = 'input window, operand 1, single buffered']
    #allocation6 [shape = 's32[1]{0}', space=sflag, size = 0x4, scoped, tag = 'scoped memory for actor_forward_padded.1']
    #allocation7 [shape = 'u8[65536]{0}', space=vmem, size = 0x10000, scoped, tag = 'input window, operand 3, single buffered']
    #allocation8 [shape = 'u8[65536]{0}', space=vmem, size = 0x10000, scoped, tag = 'input window, operand 5, single buffered']
    #allocation9 [shape = 's32[1]{0}', space=sflag, size = 0x4, scoped, tag = 'scoped memory for actor_forward_padded.1']
    #allocation10 [shape = 'u8[4096]{0}', space=vmem, size = 0x1000, scoped, tag = 'output window, operand 0, single buffered']
    %12 = vsyncpa [#allocation3], 0
    %13 = vsyncpa [#allocation6], 0
    %14 = vsyncpa [#allocation9], 0
    %15 = vsyncpa [#allocation4], 0
    // Predicated region
    $region2: #{actor_forward_padded.1} parent=1 // pred_check
      _
    $region3: #{actor_forward_padded.1} parent=1 // pred_check_branch
      %17 = sbr.rel (0) target = $region5
    $region4: #{actor_forward_padded.1} parent=1 // pred_region
      %s19 = ssub.s32 128, 128
      %20 = vsyncadd [#allocation3], %s19
      %s22 = sshll.u32 [#allocation2], 4
      %s23 = int_to_ptr.vmem [resolvable:$true] %s22
      %25 = dma.hbm_to_vmem [thread:$0]  %s0, 128, %s23, [#allocation3]
    $region5: #{actor_forward_padded.1} parent=1 // pred_fallthru
      _
    // Predicated region
    $region6: #{actor_forward_padded.1} parent=1 // pred_check
      _
    $region7: #{actor_forward_padded.1} parent=1 // pred_check_branch
      %27 = sbr.rel (0) target = $region9
    $region8: #{actor_forward_padded.1} parent=1 // pred_region
      %s29 = ssub.s32 256, 256
      %30 = vsyncadd [#allocation6], %s29
      %s31 = sshll.u32 [#allocation5], 4
      %s32 = int_to_ptr.vmem [resolvable:$true] %s31
      %37 = dma.hbm_to_vmem [thread:$0]  %s1, 256, %s32, [#allocation6], 128, 128, 8
    $region9: #{actor_forward_padded.1} parent=1 // pred_fallthru
      _
    // Predicated region
    $region10: #{actor_forward_padded.1} parent=1 // pred_check
      _
    $region11: #{actor_forward_padded.1} parent=1 // pred_check_branch
      %39 = sbr.rel (0) target = $region13
    $region12: #{actor_forward_padded.1} parent=1 // pred_region
      _
    $region13: #{actor_forward_padded.1} parent=1 // pred_fallthru
      _
    // Predicated region
    $region14: #{actor_forward_padded.1} parent=1 // pred_check
      _
    $region15: #{actor_forward_padded.1} parent=1 // pred_check_branch
      %41 = sbr.rel (0) target = $region17
    $region16: #{actor_forward_padded.1} parent=1 // pred_region
      %s43 = ssub.s32 2048, 2048
      %44 = vsyncadd [#allocation6], %s43
      %s45 = sshll.u32 [#allocation7], 4
      %s46 = int_to_ptr.vmem [resolvable:$true] %s45
      %51 = dma.hbm_to_vmem [thread:$0]  %s3, 2048, %s46, [#allocation6], 128, 128, 8
    $region17: #{actor_forward_padded.1} parent=1 // pred_fallthru
      _
    // Predicated region
    $region18: #{actor_forward_padded.1} parent=1 // pred_check
      _
    $region19: #{actor_forward_padded.1} parent=1 // pred_check_branch
      %53 = sbr.rel (0) target = $region21
    $region20: #{actor_forward_padded.1} parent=1 // pred_region
      _
    $region21: #{actor_forward_padded.1} parent=1 // pred_fallthru
      _
    // Predicated region
    $region22: #{actor_forward_padded.1} parent=1 // pred_check
      _
    $region23: #{actor_forward_padded.1} parent=1 // pred_check_branch
      %55 = sbr.rel (0) target = $region25
    $region24: #{actor_forward_padded.1} parent=1 // pred_region
      %s57 = ssub.s32 2048, 2048
      %58 = vsyncadd [#allocation9], %s57
      %s59 = sshll.u32 [#allocation8], 4
      %s60 = int_to_ptr.vmem [resolvable:$true] %s59
      %65 = dma.hbm_to_vmem [thread:$0]  %s5, 2048, %s60, [#allocation9], 128, 128, 8
    $region25: #{actor_forward_padded.1} parent=1 // pred_fallthru
      _
    // Predicated region
    $region26: #{actor_forward_padded.1} parent=1 // pred_check
      _
    $region27: #{actor_forward_padded.1} parent=1 // pred_check_branch
      %67 = sbr.rel (0) target = $region29
    $region28: #{actor_forward_padded.1} parent=1 // pred_region
      _
    $region29: #{actor_forward_padded.1} parent=1 // pred_fallthru
      _
    // Predicated region
    $region30: #{actor_forward_padded.1} parent=1 // pred_check
      _
    $region31: #{actor_forward_padded.1} parent=1 // pred_check_branch
      %69 = sbr.rel (0) target = $region33
    $region32: #{actor_forward_padded.1} parent=1 // pred_region
      %70 = dma.done [#allocation3], 128
    $region33: #{actor_forward_padded.1} parent=1 // pred_fallthru
      _
    // Predicated region
    $region34: #{actor_forward_padded.1} parent=1 // pred_check
      _
    $region35: #{actor_forward_padded.1} parent=1 // pred_check_branch
      %72 = sbr.rel (0) target = $region37
    $region36: #{actor_forward_padded.1} parent=1 // pred_region
      %73 = dma.done [#allocation6], 256
    $region37: #{actor_forward_padded.1} parent=1 // pred_fallthru
      _
    // Predicated region
    $region38: #{actor_forward_padded.1} parent=1 // pred_check
      _
    $region39: #{actor_forward_padded.1} parent=1 // pred_check_branch
      %75 = sbr.rel (0) target = $region41
    $region40: #{actor_forward_padded.1} parent=1 // pred_region
      %76 = dma.done [#allocation6], 2048
    $region41: #{actor_forward_padded.1} parent=1 // pred_fallthru
      _
    // Predicated region
    $region42: #{actor_forward_padded.1} parent=1 // pred_check
      _
    $region43: #{actor_forward_padded.1} parent=1 // pred_check_branch
      %78 = sbr.rel (0) target = $region45
    $region44: #{actor_forward_padded.1} parent=1 // pred_region
      %79 = dma.done [#allocation9], 2048
    $region45: #{actor_forward_padded.1} parent=1 // pred_fallthru
      _
    %v80 = vld [vmem:[#allocation2] sm:$0xff]
    %v81 = vld [vmem:[#allocation5] sm:$0xff]
    %v82 = vld [vmem:[#allocation5 + $0x8] sm:$0xff]
    %v83 = vld [vmem:[%s2] sm:$0x1]
    %v85 = vlaneseq
    %v86 = vshrl.u32 %v85, 7
    %v87 = vsub.s32 0, %v86
    %v88 = vrot.slane %v83, %v87
    %vm90 = vcmask 130048
    %v92 = vsel %vm90, %v80, 0
    %94 = vmatprep.subr.mxu0 0.0
    %95 = vmatpush1.msra.mxu0 %v81
    %96 = vmatprep.subr.mxu0 0.0
    %97 = vmatpush1.msra.mxu0 %v82
    %98 = vmatprep.subr.mxu0 0.0
    %99 = vmatpush1.msra.mxu0 0.0
    %100 = vmatprep.subr.mxu0 0.0
    %101 = vmatpush1.msra.mxu0 0.0
    %102 = vmatprep.subr.mxu0 0.0
    %103 = vmatpush1.msra.mxu0 0.0
    %104 = vmatprep.subr.mxu0 0.0
    %105 = vmatpush1.msra.mxu0 0.0
    %106 = vmatprep.subr.mxu0 0.0
    %107 = vmatpush1.msra.mxu0 0.0
    %108 = vmatprep.subr.mxu0 0.0
    %109 = vmatpush1.msra.mxu0 0.0
    %110 = vmatprep.subr.mxu0 0.0
    %111 = vmatpush1.msra.mxu0 0.0
    %112 = vmatprep.subr.mxu0 0.0
    %113 = vmatpush1.msra.mxu0 0.0
    %114 = vmatprep.subr.mxu0 0.0
    %115 = vmatpush1.msra.mxu0 0.0
    %116 = vmatprep.subr.mxu0 0.0
    %117 = vmatpush1.msra.mxu0 0.0
    %118 = vmatprep.subr.mxu0 0.0
    %119 = vmatpush1.msra.mxu0 0.0
    %120 = vmatprep.subr.mxu0 0.0
    %121 = vmatpush1.msra.mxu0 0.0
    %122 = vmatprep.subr.mxu0 0.0
    %123 = vmatpush1.msra.mxu0 0.0
    %124 = vmatprep.subr.mxu0 0.0
    %125 = vmatpush1.msra.mxu0 0.0
    %126 = vmatprep.subr.mxu0 0.0
    %127 = vmatpush1.msra.mxu0 0.0
    %128 = vmatprep.subr.mxu0 0.0
    %129 = vmatpush1.msra.mxu0 0.0
    %130 = vmatprep.subr.mxu0 0.0
    %131 = vmatpush1.msra.mxu0 0.0
    %132 = vmatprep.subr.mxu0 0.0
    %133 = vmatpush1.msra.mxu0 0.0
    %134 = vmatprep.subr.mxu0 0.0
    %135 = vmatpush1.msra.mxu0 0.0
    %136 = vmatprep.subr.mxu0 0.0
    %137 = vmatpush1.msra.mxu0 0.0
    %138 = vmatprep.subr.mxu0 0.0
    %139 = vmatpush1.msra.mxu0 0.0
    %140 = vmatprep.subr.mxu0 0.0
    %141 = vmatpush1.msra.mxu0 0.0
    %142 = vmatprep.subr.mxu0 0.0
    %143 = vmatpush1.msra.mxu0 0.0
    %144 = vmatprep.subr.mxu0 0.0
    %145 = vmatpush1.msra.mxu0 0.0
    %146 = vmatprep.subr.mxu0 0.0
    %147 = vmatpush1.msra.mxu0 0.0
    %148 = vmatprep.subr.mxu0 0.0
    %149 = vmatpush1.msra.mxu0 0.0
    %150 = vmatprep.subr.mxu0 0.0
    %151 = vmatpush1.msra.mxu0 0.0
    %152 = vmatprep.subr.mxu0 0.0
    %153 = vmatpush1.msra.mxu0 0.0
    %154 = vmatprep.subr.mxu0 0.0
    %155 = vmatpush1.msra.mxu0 0.0
    %156 = vmatprep.subr.mxu0 0.0
    %157 = vmatpush1.msra.mxu0 0.0
    %158 = vmatprep.mubr.f32.mxu0 0.0
    %159 = vmatmul.mubr.f32.gmra.mrb[0].mxu0 %v92
    %v160 = vpop.f32.mrb[0].mxu0
    %v161 = vadd.f32 %v88, %v160
    %v162 = vpop.f32.mrb[0].mxu0
    %163 = vdwg.mxu0
    %v164 = vmax.f32 %v161, 0.0
    %v165 = vrot.slane %v164, 4
    %v166 = vadd.f32 %v164, %v165
    %v167 = vrot.slane %v166, 2
    %v168 = vadd.f32 %v166, %v167
    %v169 = vrot.slane %v168, 1
    %v170 = vadd.f32 %v168, %v169
    %v171 = vmul.f32 %v170, 0.125
    %v172 = vsub.f32 %v164, %v171
    %v173 = vmul.f32 %v172, %v172
    %v174 = vrot.slane %v173, 4
    %v175 = vadd.f32 %v173, %v174
    %v176 = vrot.slane %v175, 2
    %v177 = vadd.f32 %v175, %v176
    %v178 = vrot.slane %v177, 1
    %v179 = vadd.f32 %v177, %v178
    %v180 = vmul.f32 %v179, 0.125
    %v181 = vadd.f32 %v180, 1e-05
    %v182 = vrsqrt.pop %v181
    %v183 = vmul.f32 %v172, %v182
    %v184 = vld [vmem:[#allocation7] sm:$0xff]
    %v185 = vld [vmem:[#allocation7 + $0x8] sm:$0xff]
    %v186 = vld [vmem:[#allocation7 + $0x10] sm:$0xff]
    %v187 = vld [vmem:[#allocation7 + $0x18] sm:$0xff]
    %v188 = vld [vmem:[#allocation7 + $0x20] sm:$0xff]
    %v189 = vld [vmem:[#allocation7 + $0x28] sm:$0xff]
    %v190 = vld [vmem:[#allocation7 + $0x30] sm:$0xff]
    %v191 = vld [vmem:[#allocation7 + $0x38] sm:$0xff]
    %v192 = vld [vmem:[#allocation7 + $0x40] sm:$0xff]
    %v193 = vld [vmem:[#allocation7 + $0x48] sm:$0xff]
    %v194 = vld [vmem:[#allocation7 + $0x50] sm:$0xff]
    %v195 = vld [vmem:[#allocation7 + $0x58] sm:$0xff]
    %v196 = vld [vmem:[#allocation7 + $0x60] sm:$0xff]
    %v197 = vld [vmem:[#allocation7 + $0x68] sm:$0xff]
    %v198 = vld [vmem:[#allocation7 + $0x70] sm:$0xff]
    %v199 = vld [vmem:[#allocation7 + $0x78] sm:$0xff]
    %v200 = vld [vmem:[%s4] sm:$0x1]
    %v202 = vlaneseq
    %v203 = vshrl.u32 %v202, 7
    %v204 = vsub.s32 0, %v203
    %v205 = vrot.slane %v200, %v204
    %207 = vmatprep.subr.mxu0 0.0
    %208 = vmatpush1.msra.mxu0 %v184
    %209 = vmatprep.subr.mxu0 0.0
    %210 = vmatpush1.msra.mxu0 %v185
    %211 = vmatprep.subr.mxu0 0.0
    %212 = vmatpush1.msra.mxu0 %v186
    %213 = vmatprep.subr.mxu0 0.0
    %214 = vmatpush1.msra.mxu0 %v187
    %215 = vmatprep.subr.mxu0 0.0
    %216 = vmatpush1.msra.mxu0 %v188
    %217 = vmatprep.subr.mxu0 0.0
    %218 = vmatpush1.msra.mxu0 %v189
    %219 = vmatprep.subr.mxu0 0.0
    %220 = vmatpush1.msra.mxu0 %v190
    %221 = vmatprep.subr.mxu0 0.0
    %222 = vmatpush1.msra.mxu0 %v191
    %223 = vmatprep.subr.mxu0 0.0
    %224 = vmatpush1.msra.mxu0 %v192
    %225 = vmatprep.subr.mxu0 0.0
    %226 = vmatpush1.msra.mxu0 %v193
    %227 = vmatprep.subr.mxu0 0.0
    %228 = vmatpush1.msra.mxu0 %v194
    %229 = vmatprep.subr.mxu0 0.0
    %230 = vmatpush1.msra.mxu0 %v195
    %231 = vmatprep.subr.mxu0 0.0
    %232 = vmatpush1.msra.mxu0 %v196
    %233 = vmatprep.subr.mxu0 0.0
    %234 = vmatpush1.msra.mxu0 %v197
    %235 = vmatprep.subr.mxu0 0.0
    %236 = vmatpush1.msra.mxu0 %v198
    %237 = vmatprep.subr.mxu0 0.0
    %238 = vmatpush1.msra.mxu0 %v199
    %239 = vmatprep.subr.mxu0 0.0
    %240 = vmatpush1.msra.mxu0 0.0
    %241 = vmatprep.subr.mxu0 0.0
    %242 = vmatpush1.msra.mxu0 0.0
    %243 = vmatprep.subr.mxu0 0.0
    %244 = vmatpush1.msra.mxu0 0.0
    %245 = vmatprep.subr.mxu0 0.0
    %246 = vmatpush1.msra.mxu0 0.0
    %247 = vmatprep.subr.mxu0 0.0
    %248 = vmatpush1.msra.mxu0 0.0
    %249 = vmatprep.subr.mxu0 0.0
    %250 = vmatpush1.msra.mxu0 0.0
    %251 = vmatprep.subr.mxu0 0.0
    %252 = vmatpush1.msra.mxu0 0.0
    %253 = vmatprep.subr.mxu0 0.0
    %254 = vmatpush1.msra.mxu0 0.0
    %255 = vmatprep.subr.mxu0 0.0
    %256 = vmatpush1.msra.mxu0 0.0
    %257 = vmatprep.subr.mxu0 0.0
    %258 = vmatpush1.msra.mxu0 0.0
    %259 = vmatprep.subr.mxu0 0.0
    %260 = vmatpush1.msra.mxu0 0.0
    %261 = vmatprep.subr.mxu0 0.0
    %262 = vmatpush1.msra.mxu0 0.0
    %263 = vmatprep.subr.mxu0 0.0
    %264 = vmatpush1.msra.mxu0 0.0
    %265 = vmatprep.subr.mxu0 0.0
    %266 = vmatpush1.msra.mxu0 0.0
    %267 = vmatprep.subr.mxu0 0.0
    %268 = vmatpush1.msra.mxu0 0.0
    %269 = vmatprep.subr.mxu0 0.0
    %270 = vmatpush1.msra.mxu0 0.0
    %271 = vmatprep.mubr.f32.mxu0 0.0
    %272 = vmatmul.mubr.f32.gmra.mrb[0].mxu0 %v183
    %v273 = vpop.f32.mrb[0].mxu0
    %v274 = vadd.f32 %v205, %v273
    %v275 = vpop.f32.mrb[0].mxu0
    %276 = vdwg.mxu0
    %v277 = vmax.f32 %v274, 0.0
    %v278 = vld [vmem:[#allocation8] sm:$0xff]
    %v279 = vld [vmem:[#allocation8 + $0x8] sm:$0xff]
    %v280 = vld [vmem:[#allocation8 + $0x10] sm:$0xff]
    %v281 = vld [vmem:[#allocation8 + $0x18] sm:$0xff]
    %v282 = vld [vmem:[#allocation8 + $0x20] sm:$0xff]
    %v283 = vld [vmem:[#allocation8 + $0x28] sm:$0xff]
    %v284 = vld [vmem:[#allocation8 + $0x30] sm:$0xff]
    %v285 = vld [vmem:[#allocation8 + $0x38] sm:$0xff]
    %v286 = vld [vmem:[#allocation8 + $0x40] sm:$0xff]
    %v287 = vld [vmem:[#allocation8 + $0x48] sm:$0xff]
    %v288 = vld [vmem:[#allocation8 + $0x50] sm:$0xff]
    %v289 = vld [vmem:[#allocation8 + $0x58] sm:$0xff]
    %v290 = vld [vmem:[#allocation8 + $0x60] sm:$0xff]
    %v291 = vld [vmem:[#allocation8 + $0x68] sm:$0xff]
    %v292 = vld [vmem:[#allocation8 + $0x70] sm:$0xff]
    %v293 = vld [vmem:[#allocation8 + $0x78] sm:$0xff]
    %v294 = vld [vmem:[%s6] sm:$0x1]
    %v296 = vlaneseq
    %v297 = vshrl.u32 %v296, 7
    %v298 = vsub.s32 0, %v297
    %v299 = vrot.slane %v294, %v298
    %301 = vmatprep.subr.mxu0 0.0
    %302 = vmatpush1.msra.mxu0 %v278
    %303 = vmatprep.subr.mxu0 0.0
    %304 = vmatpush1.msra.mxu0 %v279
    %305 = vmatprep.subr.mxu0 0.0
    %306 = vmatpush1.msra.mxu0 %v280
    %307 = vmatprep.subr.mxu0 0.0
    %308 = vmatpush1.msra.mxu0 %v281
    %309 = vmatprep.subr.mxu0 0.0
    %310 = vmatpush1.msra.mxu0 %v282
    %311 = vmatprep.subr.mxu0 0.0
    %312 = vmatpush1.msra.mxu0 %v283
    %313 = vmatprep.subr.mxu0 0.0
    %314 = vmatpush1.msra.mxu0 %v284
    %315 = vmatprep.subr.mxu0 0.0
    %316 = vmatpush1.msra.mxu0 %v285
    %317 = vmatprep.subr.mxu0 0.0
    %318 = vmatpush1.msra.mxu0 %v286
    %319 = vmatprep.subr.mxu0 0.0
    %320 = vmatpush1.msra.mxu0 %v287
    %321 = vmatprep.subr.mxu0 0.0
    %322 = vmatpush1.msra.mxu0 %v288
    %323 = vmatprep.subr.mxu0 0.0
    %324 = vmatpush1.msra.mxu0 %v289
    %325 = vmatprep.subr.mxu0 0.0
    %326 = vmatpush1.msra.mxu0 %v290
    %327 = vmatprep.subr.mxu0 0.0
    %328 = vmatpush1.msra.mxu0 %v291
    %329 = vmatprep.subr.mxu0 0.0
    %330 = vmatpush1.msra.mxu0 %v292
    %331 = vmatprep.subr.mxu0 0.0
    %332 = vmatpush1.msra.mxu0 %v293
    %333 = vmatprep.subr.mxu0 0.0
    %334 = vmatpush1.msra.mxu0 0.0
    %335 = vmatprep.subr.mxu0 0.0
    %336 = vmatpush1.msra.mxu0 0.0
    %337 = vmatprep.subr.mxu0 0.0
    %338 = vmatpush1.msra.mxu0 0.0
    %339 = vmatprep.subr.mxu0 0.0
    %340 = vmatpush1.msra.mxu0 0.0
    %341 = vmatprep.subr.mxu0 0.0
    %342 = vmatpush1.msra.mxu0 0.0
    %343 = vmatprep.subr.mxu0 0.0
    %344 = vmatpush1.msra.mxu0 0.0
    %345 = vmatprep.subr.mxu0 0.0
    %346 = vmatpush1.msra.mxu0 0.0
    %347 = vmatprep.subr.mxu0 0.0
    %348 = vmatpush1.msra.mxu0 0.0
    %349 = vmatprep.subr.mxu0 0.0
    %350 = vmatpush1.msra.mxu0 0.0
    %351 = vmatprep.subr.mxu0 0.0
    %352 = vmatpush1.msra.mxu0 0.0
    %353 = vmatprep.subr.mxu0 0.0
    %354 = vmatpush1.msra.mxu0 0.0
    %355 = vmatprep.subr.mxu0 0.0
    %356 = vmatpush1.msra.mxu0 0.0
    %357 = vmatprep.subr.mxu0 0.0
    %358 = vmatpush1.msra.mxu0 0.0
    %359 = vmatprep.subr.mxu0 0.0
    %360 = vmatpush1.msra.mxu0 0.0
    %361 = vmatprep.subr.mxu0 0.0
    %362 = vmatpush1.msra.mxu0 0.0
    %363 = vmatprep.subr.mxu0 0.0
    %364 = vmatpush1.msra.mxu0 0.0
    %365 = vmatprep.mubr.f32.mxu0 0.0
    %366 = vmatmul.mubr.f32.gmra.mrb[0].mxu0 %v277
    %v367 = vpop.f32.mrb[0].mxu0
    %v368 = vadd.f32 %v299, %v367
    %v369 = vpop.f32.mrb[0].mxu0
    %370 = vdwg.mxu0
    %v371 = vtanh.pop %v368
    %372 = vst [vmem:[#allocation10] sm:$0xff] %v371
    // Predicated region
    $region46: #{actor_forward_padded.1} parent=1 // pred_check
      _
    $region47: #{actor_forward_padded.1} parent=1 // pred_check_branch
      %374 = sbr.rel (0) target = $region49
    $region48: #{actor_forward_padded.1} parent=1 // pred_region
      %s376 = ssub.s32 128, 128
      %377 = vsyncadd [#allocation4], %s376
      %s379 = sshll.u32 [#allocation10], 4
      %s380 = int_to_ptr.vmem [resolvable:$true] %s379
      %382 = dma.vmem_to_hbm [thread:$0]  %s380, 128, %s7, [#allocation4]
    $region49: #{actor_forward_padded.1} parent=1 // pred_fallthru
      _
    // Predicated region
    $region50: #{actor_forward_padded.1} parent=1 // pred_check
      _
    $region51: #{actor_forward_padded.1} parent=1 // pred_check_branch
      %384 = sbr.rel (0) target = $region53
    $region52: #{actor_forward_padded.1} parent=1 // pred_region
      %385 = dma.done [#allocation4], 128
    $region53: #{actor_forward_padded.1} parent=1 // pred_fallthru
      _
    %386 = vsyncpa [#allocation3], 1
    %387 = vsyncpa [#allocation6], 1
    %388 = vsyncpa [#allocation9], 1
    %389 = vsyncpa [#allocation4], 1

</llo_original>
